<compile_context>
chip_gen: v6e
topology: v6e:2x2x1
jax: 0.10.0
libtpu: 0.0.40
codegen_flags: <defaults>
</compile_context>

<pallas_src>
import functools

import jax
import jax.numpy as jnp
from jax.experimental import pallas as pl
from jax.experimental.pallas import tpu as pltpu

D_IN, D_H, D_OUT = 784, 256, 1   # logical (PyTorch) dims
D_OUT_PAD = 128                  # lane-aligned width for the last weight matrix
NEG_SLOPE = 0.2


def _round_up(x, m):
    return ((x + m - 1) // m) * m


def discriminator_kernel(x_ref, w1_ref, b1_ref, w2_ref, b2_ref, w3_ref, b3_ref, o_ref):
    # Layer 1: Linear(784 -> 256) + LeakyReLU(0.2)  (f32 accumulation on the MXU)
    h1 = jnp.dot(x_ref[...], w1_ref[...], preferred_element_type=jnp.float32)
    h1 = h1 + b1_ref[...]
    h1 = jnp.where(h1 > 0, h1, NEG_SLOPE * h1)
    # Layer 2: Linear(256 -> 256) + LeakyReLU(0.2)
    h2 = jnp.dot(h1.astype(w2_ref.dtype), w2_ref[...], preferred_element_type=jnp.float32)
    h2 = h2 + b2_ref[...]
    h2 = jnp.where(h2 > 0, h2, NEG_SLOPE * h2)
    # Layer 3: Linear(256 -> 1) + Sigmoid.  w3 is zero-padded to 128 columns so
    # the matmul is lane-dense on the MXU; only column 0 is the real logit.
    h3 = jnp.dot(h2.astype(w3_ref.dtype), w3_ref[...], preferred_element_type=jnp.float32)
    logit = h3[:, 0:1] + b3_ref[...]
    o_ref[...] = jax.nn.sigmoid(logit).astype(o_ref.dtype)


def _choose_batch_tile(B):
    # ~10 MiB f32 / ~5 MiB bf16 working set at TB=512 (double-buffered x, resident
    # weights, in-kernel temporaries) -- well under the default scoped VMEM limit.
    TB_CAP = 512
    tb = min(TB_CAP, _round_up(max(B, 1), 8))
    # Keep >= 2 grid steps whenever the batch spans more than one minimal tile so
    # the "parallel" axis can be sharded across both v7x TensorCores.
    if B > 8 and pl.cdiv(B, tb) < 2:
        tb = max(8, _round_up(pl.cdiv(B, 2), 8))
    return tb


def discriminator_forward(x, padded_params):
    """x: (B, 784).  padded_params: output of pad_params().  Returns (B, 1) f32."""
    w1, b1, w2, b2, w3, b3 = padded_params
    B = x.shape[0]
    # Match the weight dtype so the HBM activation stream is bf16 on the fast path.
    x = x.astype(w1.dtype)

    TB = _choose_batch_tile(B)
    grid = (pl.cdiv(B, TB),)

    w_bytes = sum(int(p.size) * p.dtype.itemsize for p in padded_params)
    cost = pl.CostEstimate(
        flops=2 * B * (D_IN * D_H + D_H * D_H + D_H * D_OUT_PAD),
        transcendentals=B * D_OUT,
        bytes_accessed=w_bytes + B * D_IN * x.dtype.itemsize + B * D_OUT * 4,
    )

    const = lambda shape: pl.BlockSpec(shape, lambda i: (0, 0))  # VMEM-resident params
    out = pl.pallas_call(
        discriminator_kernel,
        out_shape=jax.ShapeDtypeStruct((B, D_OUT), jnp.float32),
        grid=grid,
        in_specs=[
            pl.BlockSpec((TB, D_IN), lambda i: (i, 0)),   # x: batch-tiled, unpadded
            const((D_IN, D_H)), const((1, D_H)),          # w1, b1
            const((D_H, D_H)), const((1, D_H)),           # w2, b2
            const((D_H, D_OUT_PAD)), const((1, D_OUT)),   # w3 (padded cols), b3
        ],
        out_specs=pl.BlockSpec((TB, D_OUT), lambda i: (i, 0)),
        compiler_params=pltpu.CompilerParams(
            dimension_semantics=("parallel",),
        ),
        cost_estimate=cost,
    )(x, w1, b1, w2, b2, w3, b3)
    return out


def init_params(key):
    """Logical params mimicking PyTorch nn.Linear default init.

    Weights are stored as (in_features, out_features) -- transposed relative to
    PyTorch's (out, in) -- so the kernel computes x @ W + b directly on the MXU.
    """
    ks = jax.random.split(key, 6)

    def linear(kw, kb, fan_in, fan_out):
        bound = 1.0 / (fan_in ** 0.5)
        w = jax.random.uniform(kw, (fan_in, fan_out), jnp.float32, -bound, bound)
        b = jax.random.uniform(kb, (1, fan_out), jnp.float32, -bound, bound)
        return w, b

    w1, b1 = linear(ks[0], ks[1], D_IN, D_H)
    w2, b2 = linear(ks[2], ks[3], D_H, D_H)
    w3, b3 = linear(ks[4], ks[5], D_H, D_OUT)
    return (w1, b1, w2, b2, w3, b3)


def pad_params(params, dtype=jnp.bfloat16):
    """Cast weights to the matmul dtype; zero-pad only w3's 1-wide output to 128 lanes.

    bf16 (default) halves weight + activation HBM traffic; pass dtype=jnp.float32
    for a high-precision path.  Biases stay f32 (added to the f32 accumulator).
    """
    w1, b1, w2, b2, w3, b3 = params
    w3p = jnp.pad(w3, ((0, 0), (0, D_OUT_PAD - D_OUT))).astype(dtype)
    return (w1.astype(dtype), b1.astype(jnp.float32),
            w2.astype(dtype), b2.astype(jnp.float32),
            w3p, b3.astype(jnp.float32))


def reference_forward(x, params):
    w1, b1, w2, b2, w3, b3 = params
    h1 = x @ w1 + b1
    h1 = jnp.where(h1 > 0, h1, NEG_SLOPE * h1)
    h2 = h1 @ w2 + b2
    h2 = jnp.where(h2 > 0, h2, NEG_SLOPE * h2)
    return jax.nn.sigmoid(h2 @ w3 + b3)


if __name__ == "__main__":
    key = jax.random.PRNGKey(0)
    k_params, k_x1, k_x2 = jax.random.split(key, 3)

    params = init_params(k_params)
    fwd = jax.jit(functools.partial(discriminator_forward))

    # 1) f32 path, small batch (matches the module's per-step GAN usage).
    batch = 8
    x = jax.random.normal(k_x1, (batch, D_IN), jnp.float32)
    out = jax.block_until_ready(fwd(x, pad_params(params, dtype=jnp.float32)))
    ref = reference_forward(x, params)
    assert out.shape == (batch, D_OUT), out.shape
    assert jnp.allclose(out, ref, atol=5e-5, rtol=1e-4), "f32 mismatch vs reference"

    # 2) bf16 fast path, ragged batch (exercises the partial last batch block).
    batch2 = 13
    x2 = jax.random.normal(k_x2, (batch2, D_IN), jnp.float32)
    out2 = jax.block_until_ready(fwd(x2, pad_params(params, dtype=jnp.bfloat16)))
    ref2 = reference_forward(x2, params)
    assert out2.shape == (batch2, D_OUT), out2.shape
    assert jnp.allclose(out2, ref2, atol=3e-2, rtol=3e-2), "bf16 mismatch vs reference"

    print("KERNEL_OK")
</pallas_src>

<mosaic_0001>
module attributes {stable_mosaic.version = 11 : i64} {
  func.func @discriminator_kernel(%arg0: i32, %arg1: memref<8x784xf32, #tpu.memory_space<vmem>>, %arg2: memref<784x256xf32, #tpu.memory_space<vmem>>, %arg3: memref<1x256xf32, #tpu.memory_space<vmem>>, %arg4: memref<256x256xf32, #tpu.memory_space<vmem>>, %arg5: memref<1x256xf32, #tpu.memory_space<vmem>>, %arg6: memref<256x128xf32, #tpu.memory_space<vmem>>, %arg7: memref<1x1xf32, #tpu.memory_space<vmem>>, %arg8: memref<8x1xf32, #tpu.memory_space<vmem>>) attributes {dimension_semantics = [#tpu.dimension_semantics<parallel>], iteration_bounds = array<i64: 1>, scalar_prefetch = 0 : i64, scratch_operands = 0 : i64, tpu.core_type = #tpu.core_type<tc>, window_params = [{transform_indices = @transform_0, window_bounds = array<i64: 8, 784>}, {pipeline_mode = #tpu.pipeline_mode<synchronous>, transform_indices = @transform_1, window_bounds = array<i64: 784, 256>}, {pipeline_mode = #tpu.pipeline_mode<synchronous>, transform_indices = @transform_2, window_bounds = array<i64: 1, 256>}, {pipeline_mode = #tpu.pipeline_mode<synchronous>, transform_indices = @transform_3, window_bounds = array<i64: 256, 256>}, {pipeline_mode = #tpu.pipeline_mode<synchronous>, transform_indices = @transform_4, window_bounds = array<i64: 1, 256>}, {pipeline_mode = #tpu.pipeline_mode<synchronous>, transform_indices = @transform_5, window_bounds = array<i64: 256, 128>}, {pipeline_mode = #tpu.pipeline_mode<synchronous>, transform_indices = @transform_6, window_bounds = array<i64: 1, 1>}, {transform_indices = @transform_7, window_bounds = array<i64: 8, 1>}]} {
    %c0 = arith.constant 0 : index
    %c0_0 = arith.constant 0 : index
    %0 = vector.load %arg1[%c0, %c0_0] : memref<8x784xf32, #tpu.memory_space<vmem>>, vector<8x784xf32>
    %c0_1 = arith.constant 0 : index
    %c0_2 = arith.constant 0 : index
    %1 = vector.load %arg2[%c0_1, %c0_2] : memref<784x256xf32, #tpu.memory_space<vmem>>, vector<784x256xf32>
    %cst = arith.constant dense<0.000000e+00> : vector<8x256xf32>
    %2 = tpu.matmul %0, %1, %cst {dimension_numbers = #tpu.dot_dimension_numbers<[1], [0], [0], [1], [0, 0, 1, 1], [], []>} : vector<8x784xf32>, vector<784x256xf32>, vector<8x256xf32> -> vector<8x256xf32>
    %c0_3 = arith.constant 0 : index
    %c0_4 = arith.constant 0 : index
    %3 = vector.load %arg3[%c0_3, %c0_4] : memref<1x256xf32, #tpu.memory_space<vmem>>, vector<1x256xf32>
    %4 = vector.broadcast %3 : vector<1x256xf32> to vector<8x256xf32>
    %5 = arith.addf %2, %4 : vector<8x256xf32>
    %cst_5 = arith.constant 0.000000e+00 : f32
    %6 = vector.broadcast %cst_5 : f32 to vector<8x256xf32>
    %7 = arith.cmpf ogt, %5, %6 : vector<8x256xf32>
    %cst_6 = arith.constant 2.000000e-01 : f32
    %8 = vector.broadcast %cst_6 : f32 to vector<8x256xf32>
    %9 = arith.mulf %8, %5 : vector<8x256xf32>
    %10 = arith.select %7, %5, %9 : vector<8x256xi1>, vector<8x256xf32>
    %c0_7 = arith.constant 0 : index
    %c0_8 = arith.constant 0 : index
    %11 = vector.load %arg4[%c0_7, %c0_8] : memref<256x256xf32, #tpu.memory_space<vmem>>, vector<256x256xf32>
    %cst_9 = arith.constant dense<0.000000e+00> : vector<8x256xf32>
    %12 = tpu.matmul %10, %11, %cst_9 {dimension_numbers = #tpu.dot_dimension_numbers<[1], [0], [0], [1], [0, 0, 1, 1], [], []>} : vector<8x256xf32>, vector<256x256xf32>, vector<8x256xf32> -> vector<8x256xf32>
    %c0_10 = arith.constant 0 : index
    %c0_11 = arith.constant 0 : index
    %13 = vector.load %arg5[%c0_10, %c0_11] : memref<1x256xf32, #tpu.memory_space<vmem>>, vector<1x256xf32>
    %14 = vector.broadcast %13 : vector<1x256xf32> to vector<8x256xf32>
    %15 = arith.addf %12, %14 : vector<8x256xf32>
    %cst_12 = arith.constant 0.000000e+00 : f32
    %16 = vector.broadcast %cst_12 : f32 to vector<8x256xf32>
    %17 = arith.cmpf ogt, %15, %16 : vector<8x256xf32>
    %cst_13 = arith.constant 2.000000e-01 : f32
    %18 = vector.broadcast %cst_13 : f32 to vector<8x256xf32>
    %19 = arith.mulf %18, %15 : vector<8x256xf32>
    %20 = arith.select %17, %15, %19 : vector<8x256xi1>, vector<8x256xf32>
    %c0_14 = arith.constant 0 : index
    %c0_15 = arith.constant 0 : index
    %21 = vector.load %arg6[%c0_14, %c0_15] : memref<256x128xf32, #tpu.memory_space<vmem>>, vector<256x128xf32>
    %cst_16 = arith.constant dense<0.000000e+00> : vector<8x128xf32>
    %22 = tpu.matmul %20, %21, %cst_16 {dimension_numbers = #tpu.dot_dimension_numbers<[1], [0], [0], [1], [0, 0, 1, 1], [], []>} : vector<8x256xf32>, vector<256x128xf32>, vector<8x128xf32> -> vector<8x128xf32>
    %23 = vector.extract_strided_slice %22 {offsets = [0, 0], sizes = [8, 1], strides = [1, 1]} : vector<8x128xf32> to vector<8x1xf32>
    %c0_17 = arith.constant 0 : index
    %c0_18 = arith.constant 0 : index
    %24 = vector.load %arg7[%c0_17, %c0_18] : memref<1x1xf32, #tpu.memory_space<vmem>>, vector<1x1xf32>
    %25 = vector.broadcast %24 : vector<1x1xf32> to vector<8x1xf32>
    %26 = arith.addf %23, %25 : vector<8x1xf32>
    %27 = arith.negf %26 : vector<8x1xf32>
    %28 = math.exp %27 : vector<8x1xf32>
    %cst_19 = arith.constant 1.000000e+00 : f32
    %29 = vector.broadcast %cst_19 : f32 to vector<8x1xf32>
    %30 = arith.addf %29, %28 : vector<8x1xf32>
    %31 = arith.divf %29, %30 : vector<8x1xf32>
    %c0_20 = arith.constant 0 : index
    %c0_21 = arith.constant 0 : index
    %32 = vector.load %arg8[%c0_20, %c0_21] : memref<8x1xf32, #tpu.memory_space<vmem>>, vector<8x1xf32>
    tpu.vector_store %arg8[%c0_20, %c0_21], %31 {strides = array<i32>} : memref<8x1xf32, #tpu.memory_space<vmem>>, vector<8x1xf32>,
    return
  }
  func.func @transform_0(%arg0: i32) -> (i32, i32) {
    %c0_i32 = arith.constant 0 : i32
    %c0_i32_0 = arith.constant 0 : i32
    return %arg0, %c0_i32 : i32, i32
  }
  func.func @transform_1(%arg0: i32) -> (i32, i32) {
    %c0_i32 = arith.constant 0 : i32
    %c0_i32_0 = arith.constant 0 : i32
    %c0_i32_1 = arith.constant 0 : i32
    return %c0_i32, %c0_i32_0 : i32, i32
  }
  func.func @transform_2(%arg0: i32) -> (i32, i32) {
    %c0_i32 = arith.constant 0 : i32
    %c0_i32_0 = arith.constant 0 : i32
    %c0_i32_1 = arith.constant 0 : i32
    return %c0_i32, %c0_i32_0 : i32, i32
  }
  func.func @transform_3(%arg0: i32) -> (i32, i32) {
    %c0_i32 = arith.constant 0 : i32
    %c0_i32_0 = arith.constant 0 : i32
    %c0_i32_1 = arith.constant 0 : i32
    return %c0_i32, %c0_i32_0 : i32, i32
  }
  func.func @transform_4(%arg0: i32) -> (i32, i32) {
    %c0_i32 = arith.constant 0 : i32
    %c0_i32_0 = arith.constant 0 : i32
    %c0_i32_1 = arith.constant 0 : i32
    return %c0_i32, %c0_i32_0 : i32, i32
  }
  func.func @transform_5(%arg0: i32) -> (i32, i32) {
    %c0_i32 = arith.constant 0 : i32
    %c0_i32_0 = arith.constant 0 : i32
    %c0_i32_1 = arith.constant 0 : i32
    return %c0_i32, %c0_i32_0 : i32, i32
  }
  func.func @transform_6(%arg0: i32) -> (i32, i32) {
    %c0_i32 = arith.constant 0 : i32
    %c0_i32_0 = arith.constant 0 : i32
    %c0_i32_1 = arith.constant 0 : i32
    return %c0_i32, %c0_i32_0 : i32, i32
  }
  func.func @transform_7(%arg0: i32) -> (i32, i32) {
    %c0_i32 = arith.constant 0 : i32
    %c0_i32_0 = arith.constant 0 : i32
    return %arg0, %c0_i32 : i32, i32
  }
}

</mosaic_0001>

<llo_original>
// kernel: discriminator_forward.1
$region0: #{discriminator_forward.1}
  #allocation0 [shape = 'u32[]', space=smem, size = 0x4, offset = 0x4, fixed_abs, tag = 'smem constant byte address 0x4 - core index']
  #allocation1 [shape = 'u32[144,128]{1,0:T(1,128)}', space=vmem, size = 0x12000, scoped, tag = 'internal scratch']
  #allocation2 [shape = 'f32[1,1]{1,0:T(1,128)S(1)}', space=vmem, size = 0x200, scoped, tag = 'scoped memory for discriminator_forward.1']
  %s0 = inlined_call_operand.hbm [shape: f32[8,784], index: 0, kind: input, shape index: {}]
  %s1 = inlined_call_operand.hbm [shape: f32[784,256], index: 1, kind: input, shape index: {}]
  %s2 = inlined_call_operand.vmem [shape: f32[1,256], index: 2, kind: input, shape index: {}]
  %s3 = inlined_call_operand.hbm [shape: f32[256,256], index: 3, kind: input, shape index: {}]
  %s4 = inlined_call_operand.vmem [shape: f32[1,256], index: 4, kind: input, shape index: {}]
  %s5 = inlined_call_operand.hbm [shape: f32[256,128], index: 5, kind: input, shape index: {}]
  %s6 = inlined_call_operand.<no memory space> [shape: f32[1,1], index: 6, kind: input, shape index: {}]
  %s7 = inlined_call_operand.vmem [shape: f32[8,1], index: 7, kind: output, shape index: {}]
  %s8 = sld [smem:[#allocation0]]
  $region54: #{discriminator_forward.1} parent=0
    _
  %s10 = ssub.s32 1, %s8
  %s11 = scalar_select 0, %s10, %s8
  %v12 = vstv %s6
  %13 = vst [vmem:[#allocation2] sm:$0x1] %v12
  $region1: #{discriminator_forward.1} parent=0
    #allocation3 [shape = 'u8[28672]{0}', space=vmem, size = 0x7000, scoped, tag = 'input window, operand 0, single buffered']
    #allocation4 [shape = 's32[1]{0}', space=sflag, size = 0x4, scoped, tag = 'scoped memory for discriminator_forward.1']
    #allocation5 [shape = 'u8[802816]{0}', space=vmem, size = 0xc4000, scoped, tag = 'input window, operand 1, single buffered']
    #allocation6 [shape = 's32[1]{0}', space=sflag, size = 0x4, scoped, tag = 'scoped memory for discriminator_forward.1']
    #allocation7 [shape = 'u8[262144]{0}', space=vmem, size = 0x40000, scoped, tag = 'input window, operand 3, single buffered']
    #allocation8 [shape = 'u8[131072]{0}', space=vmem, size = 0x20000, scoped, tag = 'input window, operand 5, single buffered']
    #allocation9 [shape = 's32[1]{0}', space=sflag, size = 0x4, scoped, tag = 'scoped memory for discriminator_forward.1']
    %14 = vsyncpa [#allocation4], 0
    %15 = vsyncpa [#allocation6], 0
    %16 = vsyncpa [#allocation9], 0
    // Predicated region
    $region2: #{discriminator_forward.1} parent=1 // pred_check
      _
    $region3: #{discriminator_forward.1} parent=1 // pred_check_branch
      %18 = sbr.rel (0) target = $region5
    $region4: #{discriminator_forward.1} parent=1 // pred_region
      %s20 = ssub.s32 896, 896
      %21 = vsyncadd [#allocation4], %s20
      %s23 = sshll.u32 [#allocation3], 4
      %s24 = int_to_ptr.vmem [resolvable:$true] %s23
      %26 = dma.hbm_to_vmem [thread:$0]  %s0, 896, %s24, [#allocation4]
    $region5: #{discriminator_forward.1} parent=1 // pred_fallthru
      _
    // Predicated region
    $region6: #{discriminator_forward.1} parent=1 // pred_check
      _
    $region7: #{discriminator_forward.1} parent=1 // pred_check_branch
      %28 = sbr.rel (0) target = $region9
    $region8: #{discriminator_forward.1} parent=1 // pred_region
      %s30 = ssub.s32 25088, 25088
      %31 = vsyncadd [#allocation6], %s30
      %s32 = sshll.u32 [#allocation5], 4
      %s33 = int_to_ptr.vmem [resolvable:$true] %s32
      %38 = dma.hbm_to_vmem [thread:$0]  %s1, 25088, %s33, [#allocation6], 256, 256, 16
    $region9: #{discriminator_forward.1} parent=1 // pred_fallthru
      _
    // Predicated region
    $region10: #{discriminator_forward.1} parent=1 // pred_check
      _
    $region11: #{discriminator_forward.1} parent=1 // pred_check_branch
      %40 = sbr.rel (0) target = $region13
    $region12: #{discriminator_forward.1} parent=1 // pred_region
      _
    $region13: #{discriminator_forward.1} parent=1 // pred_fallthru
      _
    // Predicated region
    $region14: #{discriminator_forward.1} parent=1 // pred_check
      _
    $region15: #{discriminator_forward.1} parent=1 // pred_check_branch
      %42 = sbr.rel (0) target = $region17
    $region16: #{discriminator_forward.1} parent=1 // pred_region
      %s44 = ssub.s32 8192, 8192
      %45 = vsyncadd [#allocation6], %s44
      %s46 = sshll.u32 [#allocation7], 4
      %s47 = int_to_ptr.vmem [resolvable:$true] %s46
      %52 = dma.hbm_to_vmem [thread:$0]  %s3, 8192, %s47, [#allocation6], 256, 256, 16
    $region17: #{discriminator_forward.1} parent=1 // pred_fallthru
      _
    // Predicated region
    $region18: #{discriminator_forward.1} parent=1 // pred_check
      _
    $region19: #{discriminator_forward.1} parent=1 // pred_check_branch
      %54 = sbr.rel (0) target = $region21
    $region20: #{discriminator_forward.1} parent=1 // pred_region
      _
    $region21: #{discriminator_forward.1} parent=1 // pred_fallthru
      _
    // Predicated region
    $region22: #{discriminator_forward.1} parent=1 // pred_check
      _
    $region23: #{discriminator_forward.1} parent=1 // pred_check_branch
      %56 = sbr.rel (0) target = $region25
    $region24: #{discriminator_forward.1} parent=1 // pred_region
      %s58 = ssub.s32 4096, 4096
      %59 = vsyncadd [#allocation9], %s58
      %s60 = sshll.u32 [#allocation8], 4
      %s61 = int_to_ptr.vmem [resolvable:$true] %s60
      %66 = dma.hbm_to_vmem [thread:$0]  %s5, 4096, %s61, [#allocation9], 128, 128, 8
    $region25: #{discriminator_forward.1} parent=1 // pred_fallthru
      _
    // Predicated region
    $region26: #{discriminator_forward.1} parent=1 // pred_check
      _
    $region27: #{discriminator_forward.1} parent=1 // pred_check_branch
      %68 = sbr.rel (0) target = $region29
    $region28: #{discriminator_forward.1} parent=1 // pred_region
      _
    $region29: #{discriminator_forward.1} parent=1 // pred_fallthru
      _
    // Predicated region
    $region30: #{discriminator_forward.1} parent=1 // pred_check
      _
    $region31: #{discriminator_forward.1} parent=1 // pred_check_branch
      %70 = sbr.rel (0) target = $region33
    $region32: #{discriminator_forward.1} parent=1 // pred_region
      %71 = dma.done [#allocation4], 896
    $region33: #{discriminator_forward.1} parent=1 // pred_fallthru
      _
    // Predicated region
    $region34: #{discriminator_forward.1} parent=1 // pred_check
      _
    $region35: #{discriminator_forward.1} parent=1 // pred_check_branch
      %73 = sbr.rel (0) target = $region37
    $region36: #{discriminator_forward.1} parent=1 // pred_region
      %74 = dma.done [#allocation6], 25088
    $region37: #{discriminator_forward.1} parent=1 // pred_fallthru
      _
    // Predicated region
    $region38: #{discriminator_forward.1} parent=1 // pred_check
      _
    $region39: #{discriminator_forward.1} parent=1 // pred_check_branch
      %76 = sbr.rel (0) target = $region41
    $region40: #{discriminator_forward.1} parent=1 // pred_region
      %77 = dma.done [#allocation6], 8192
    $region41: #{discriminator_forward.1} parent=1 // pred_fallthru
      _
    // Predicated region
    $region42: #{discriminator_forward.1} parent=1 // pred_check
      _
    $region43: #{discriminator_forward.1} parent=1 // pred_check_branch
      %79 = sbr.rel (0) target = $region45
    $region44: #{discriminator_forward.1} parent=1 // pred_region
      %80 = dma.done [#allocation9], 4096
    $region45: #{discriminator_forward.1} parent=1 // pred_fallthru
      _
    %v81 = vld [vmem:[#allocation3] sm:$0xff]
    %v82 = vld [vmem:[#allocation3 + $0x8] sm:$0xff]
    %v83 = vld [vmem:[#allocation3 + $0x10] sm:$0xff]
    %v84 = vld [vmem:[#allocation3 + $0x18] sm:$0xff]
    %v85 = vld [vmem:[#allocation3 + $0x20] sm:$0xff]
    %v86 = vld [vmem:[#allocation3 + $0x28] sm:$0xff]
    %v87 = vld [vmem:[#allocation3 + $0x30] sm:$0xff]
    %v88 = vld [vmem:[#allocation5] sm:$0xff]
    %v89 = vld [vmem:[#allocation5 + $0x8] sm:$0xff]
    %v90 = vld [vmem:[#allocation5 + $0x10] sm:$0xff]
    %v91 = vld [vmem:[#allocation5 + $0x18] sm:$0xff]
    %v92 = vld [vmem:[#allocation5 + $0x20] sm:$0xff]
    %v93 = vld [vmem:[#allocation5 + $0x28] sm:$0xff]
    %v94 = vld [vmem:[#allocation5 + $0x30] sm:$0xff]
    %v95 = vld [vmem:[#allocation5 + $0x38] sm:$0xff]
    %v96 = vld [vmem:[#allocation5 + $0x40] sm:$0xff]
    %v97 = vld [vmem:[#allocation5 + $0x48] sm:$0xff]
    %v98 = vld [vmem:[#allocation5 + $0x50] sm:$0xff]
    %v99 = vld [vmem:[#allocation5 + $0x58] sm:$0xff]
    %v100 = vld [vmem:[#allocation5 + $0x60] sm:$0xff]
    %v101 = vld [vmem:[#allocation5 + $0x68] sm:$0xff]
    %v102 = vld [vmem:[#allocation5 + $0x70] sm:$0xff]
    %v103 = vld [vmem:[#allocation5 + $0x78] sm:$0xff]
    %v104 = vld [vmem:[#allocation5 + $0x80] sm:$0xff]
    %v105 = vld [vmem:[#allocation5 + $0x88] sm:$0xff]
    %v106 = vld [vmem:[#allocation5 + $0x90] sm:$0xff]
    %v107 = vld [vmem:[#allocation5 + $0x98] sm:$0xff]
    %v108 = vld [vmem:[#allocation5 + $0xa0] sm:$0xff]
    %v109 = vld [vmem:[#allocation5 + $0xa8] sm:$0xff]
    %v110 = vld [vmem:[#allocation5 + $0xb0] sm:$0xff]
    %v111 = vld [vmem:[#allocation5 + $0xb8] sm:$0xff]
    %v112 = vld [vmem:[#allocation5 + $0xc0] sm:$0xff]
    %v113 = vld [vmem:[#allocation5 + $0xc8] sm:$0xff]
    %v114 = vld [vmem:[#allocation5 + $0xd0] sm:$0xff]
    %v115 = vld [vmem:[#allocation5 + $0xd8] sm:$0xff]
    %v116 = vld [vmem:[#allocation5 + $0xe0] sm:$0xff]
    %v117 = vld [vmem:[#allocation5 + $0xe8] sm:$0xff]
    %v118 = vld [vmem:[#allocation5 + $0xf0] sm:$0xff]
    %v119 = vld [vmem:[#allocation5 + $0xf8] sm:$0xff]
    %v120 = vld [vmem:[#allocation5 + $0x100] sm:$0xff]
    %v121 = vld [vmem:[#allocation5 + $0x108] sm:$0xff]
    %v122 = vld [vmem:[#allocation5 + $0x110] sm:$0xff]
    %v123 = vld [vmem:[#allocation5 + $0x118] sm:$0xff]
    %v124 = vld [vmem:[#allocation5 + $0x120] sm:$0xff]
    %v125 = vld [vmem:[#allocation5 + $0x128] sm:$0xff]
    %v126 = vld [vmem:[#allocation5 + $0x130] sm:$0xff]
    %v127 = vld [vmem:[#allocation5 + $0x138] sm:$0xff]
    %v128 = vld [vmem:[#allocation5 + $0x140] sm:$0xff]
    %v129 = vld [vmem:[#allocation5 + $0x148] sm:$0xff]
    %v130 = vld [vmem:[#allocation5 + $0x150] sm:$0xff]
    %v131 = vld [vmem:[#allocation5 + $0x158] sm:$0xff]
    %v132 = vld [vmem:[#allocation5 + $0x160] sm:$0xff]
    %v133 = vld [vmem:[#allocation5 + $0x168] sm:$0xff]
    %v134 = vld [vmem:[#allocation5 + $0x170] sm:$0xff]
    %v135 = vld [vmem:[#allocation5 + $0x178] sm:$0xff]
    %v136 = vld [vmem:[#allocation5 + $0x180] sm:$0xff]
    %v137 = vld [vmem:[#allocation5 + $0x188] sm:$0xff]
    %v138 = vld [vmem:[#allocation5 + $0x190] sm:$0xff]
    %v139 = vld [vmem:[#allocation5 + $0x198] sm:$0xff]
    %v140 = vld [vmem:[#allocation5 + $0x1a0] sm:$0xff]
    %v141 = vld [vmem:[#allocation5 + $0x1a8] sm:$0xff]
    %v142 = vld [vmem:[#allocation5 + $0x1b0] sm:$0xff]
    %v143 = vld [vmem:[#allocation5 + $0x1b8] sm:$0xff]
    %v144 = vld [vmem:[#allocation5 + $0x1c0] sm:$0xff]
    %v145 = vld [vmem:[#allocation5 + $0x1c8] sm:$0xff]
    %v146 = vld [vmem:[#allocation5 + $0x1d0] sm:$0xff]
    %v147 = vld [vmem:[#allocation5 + $0x1d8] sm:$0xff]
    %v148 = vld [vmem:[#allocation5 + $0x1e0] sm:$0xff]
    %v149 = vld [vmem:[#allocation5 + $0x1e8] sm:$0xff]
    %v150 = vld [vmem:[#allocation5 + $0x1f0] sm:$0xff]
    %v151 = vld [vmem:[#allocation5 + $0x1f8] sm:$0xff]
    %v152 = vld [vmem:[#allocation5 + $0x200] sm:$0xff]
    %v153 = vld [vmem:[#allocation5 + $0x208] sm:$0xff]
    %v154 = vld [vmem:[#allocation5 + $0x210] sm:$0xff]
    %v155 = vld [vmem:[#allocation5 + $0x218] sm:$0xff]
    %v156 = vld [vmem:[#allocation5 + $0x220] sm:$0xff]
    %v157 = vld [vmem:[#allocation5 + $0x228] sm:$0xff]
    %v158 = vld [vmem:[#allocation5 + $0x230] sm:$0xff]
    %v159 = vld [vmem:[#allocation5 + $0x238] sm:$0xff]
    %v160 = vld [vmem:[#allocation5 + $0x240] sm:$0xff]
    %v161 = vld [vmem:[#allocation5 + $0x248] sm:$0xff]
    %v162 = vld [vmem:[#allocation5 + $0x250] sm:$0xff]
    %v163 = vld [vmem:[#allocation5 + $0x258] sm:$0xff]
    %v164 = vld [vmem:[#allocation5 + $0x260] sm:$0xff]
    %v165 = vld [vmem:[#allocation5 + $0x268] sm:$0xff]
    %v166 = vld [vmem:[#allocation5 + $0x270] sm:$0xff]
    %v167 = vld [vmem:[#allocation5 + $0x278] sm:$0xff]
    %v168 = vld [vmem:[#allocation5 + $0x280] sm:$0xff]
    %v169 = vld [vmem:[#allocation5 + $0x288] sm:$0xff]
    %v170 = vld [vmem:[#allocation5 + $0x290] sm:$0xff]
    %v171 = vld [vmem:[#allocation5 + $0x298] sm:$0xff]
    %v172 = vld [vmem:[#allocation5 + $0x2a0] sm:$0xff]
    %v173 = vld [vmem:[#allocation5 + $0x2a8] sm:$0xff]
    %v174 = vld [vmem:[#allocation5 + $0x2b0] sm:$0xff]
    %v175 = vld [vmem:[#allocation5 + $0x2b8] sm:$0xff]
    %v176 = vld [vmem:[#allocation5 + $0x2c0] sm:$0xff]
    %v177 = vld [vmem:[#allocation5 + $0x2c8] sm:$0xff]
    %v178 = vld [vmem:[#allocation5 + $0x2d0] sm:$0xff]
    %v179 = vld [vmem:[#allocation5 + $0x2d8] sm:$0xff]
    %v180 = vld [vmem:[#allocation5 + $0x2e0] sm:$0xff]
    %v181 = vld [vmem:[#allocation5 + $0x2e8] sm:$0xff]
    %v182 = vld [vmem:[#allocation5 + $0x2f0] sm:$0xff]
    %v183 = vld [vmem:[#allocation5 + $0x2f8] sm:$0xff]
    %v184 = vld [vmem:[#allocation5 + $0x300] sm:$0xff]
    %v185 = vld [vmem:[#allocation5 + $0x308] sm:$0xff]
    %v186 = vld [vmem:[#allocation5 + $0x310] sm:$0xff]
    %v187 = vld [vmem:[#allocation5 + $0x318] sm:$0xff]
    %v188 = vld [vmem:[#allocation5 + $0x320] sm:$0xff]
    %v189 = vld [vmem:[#allocation5 + $0x328] sm:$0xff]
    %v190 = vld [vmem:[#allocation5 + $0x330] sm:$0xff]
    %v191 = vld [vmem:[#allocation5 + $0x338] sm:$0xff]
    %v192 = vld [vmem:[#allocation5 + $0x340] sm:$0xff]
    %v193 = vld [vmem:[#allocation5 + $0x348] sm:$0xff]
    %v194 = vld [vmem:[#allocation5 + $0x350] sm:$0xff]
    %v195 = vld [vmem:[#allocation5 + $0x358] sm:$0xff]
    %v196 = vld [vmem:[#allocation5 + $0x360] sm:$0xff]
    %v197 = vld [vmem:[#allocation5 + $0x368] sm:$0xff]
    %v198 = vld [vmem:[#allocation5 + $0x370] sm:$0xff]
    %v199 = vld [vmem:[#allocation5 + $0x378] sm:$0xff]
    %v200 = vld [vmem:[#allocation5 + $0x380] sm:$0xff]
    %v201 = vld [vmem:[#allocation5 + $0x388] sm:$0xff]
    %v202 = vld [vmem:[#allocation5 + $0x390] sm:$0xff]
    %v203 = vld [vmem:[#allocation5 + $0x398] sm:$0xff]
    %v204 = vld [vmem:[#allocation5 + $0x3a0] sm:$0xff]
    %v205 = vld [vmem:[#allocation5 + $0x3a8] sm:$0xff]
    %v206 = vld [vmem:[#allocation5 + $0x3b0] sm:$0xff]
    %v207 = vld [vmem:[#allocation5 + $0x3b8] sm:$0xff]
    %v208 = vld [vmem:[#allocation5 + $0x3c0] sm:$0xff]
    %v209 = vld [vmem:[#allocation5 + $0x3c8] sm:$0xff]
    %v210 = vld [vmem:[#allocation5 + $0x3d0] sm:$0xff]
    %v211 = vld [vmem:[#allocation5 + $0x3d8] sm:$0xff]
    %v212 = vld [vmem:[#allocation5 + $0x3e0] sm:$0xff]
    %v213 = vld [vmem:[#allocation5 + $0x3e8] sm:$0xff]
    %v214 = vld [vmem:[#allocation5 + $0x3f0] sm:$0xff]
    %v215 = vld [vmem:[#allocation5 + $0x3f8] sm:$0xff]
    %v216 = vld [vmem:[#allocation5 + $0x400] sm:$0xff]
    %v217 = vld [vmem:[#allocation5 + $0x408] sm:$0xff]
    %v218 = vld [vmem:[#allocation5 + $0x410] sm:$0xff]
    %v219 = vld [vmem:[#allocation5 + $0x418] sm:$0xff]
    %v220 = vld [vmem:[#allocation5 + $0x420] sm:$0xff]
    %v221 = vld [vmem:[#allocation5 + $0x428] sm:$0xff]
    %v222 = vld [vmem:[#allocation5 + $0x430] sm:$0xff]
    %v223 = vld [vmem:[#allocation5 + $0x438] sm:$0xff]
    %v224 = vld [vmem:[#allocation5 + $0x440] sm:$0xff]
    %v225 = vld [vmem:[#allocation5 + $0x448] sm:$0xff]
    %v226 = vld [vmem:[#allocation5 + $0x450] sm:$0xff]
    %v227 = vld [vmem:[#allocation5 + $0x458] sm:$0xff]
    %v228 = vld [vmem:[#allocation5 + $0x460] sm:$0xff]
    %v229 = vld [vmem:[#allocation5 + $0x468] sm:$0xff]
    %v230 = vld [vmem:[#allocation5 + $0x470] sm:$0xff]
    %v231 = vld [vmem:[#allocation5 + $0x478] sm:$0xff]
    %v232 = vld [vmem:[#allocation5 + $0x480] sm:$0xff]
    %v233 = vld [vmem:[#allocation5 + $0x488] sm:$0xff]
    %v234 = vld [vmem:[#allocation5 + $0x490] sm:$0xff]
    %v235 = vld [vmem:[#allocation5 + $0x498] sm:$0xff]
    %v236 = vld [vmem:[#allocation5 + $0x4a0] sm:$0xff]
    %v237 = vld [vmem:[#allocation5 + $0x4a8] sm:$0xff]
    %v238 = vld [vmem:[#allocation5 + $0x4b0] sm:$0xff]
    %v239 = vld [vmem:[#allocation5 + $0x4b8] sm:$0xff]
    %v240 = vld [vmem:[#allocation5 + $0x4c0] sm:$0xff]
    %v241 = vld [vmem:[#allocation5 + $0x4c8] sm:$0xff]
    %v242 = vld [vmem:[#allocation5 + $0x4d0] sm:$0xff]
    %v243 = vld [vmem:[#allocation5 + $0x4d8] sm:$0xff]
    %v244 = vld [vmem:[#allocation5 + $0x4e0] sm:$0xff]
    %v245 = vld [vmem:[#allocation5 + $0x4e8] sm:$0xff]
    %v246 = vld [vmem:[#allocation5 + $0x4f0] sm:$0xff]
    %v247 = vld [vmem:[#allocation5 + $0x4f8] sm:$0xff]
    %v248 = vld [vmem:[#allocation5 + $0x500] sm:$0xff]
    %v249 = vld [vmem:[#allocation5 + $0x508] sm:$0xff]
    %v250 = vld [vmem:[#allocation5 + $0x510] sm:$0xff]
    %v251 = vld [vmem:[#allocation5 + $0x518] sm:$0xff]
    %v252 = vld [vmem:[#allocation5 + $0x520] sm:$0xff]
    %v253 = vld [vmem:[#allocation5 + $0x528] sm:$0xff]
    %v254 = vld [vmem:[#allocation5 + $0x530] sm:$0xff]
    %v255 = vld [vmem:[#allocation5 + $0x538] sm:$0xff]
    %v256 = vld [vmem:[#allocation5 + $0x540] sm:$0xff]
    %v257 = vld [vmem:[#allocation5 + $0x548] sm:$0xff]
    %v258 = vld [vmem:[#allocation5 + $0x550] sm:$0xff]
    %v259 = vld [vmem:[#allocation5 + $0x558] sm:$0xff]
    %v260 = vld [vmem:[#allocation5 + $0x560] sm:$0xff]
    %v261 = vld [vmem:[#allocation5 + $0x568] sm:$0xff]
    %v262 = vld [vmem:[#allocation5 + $0x570] sm:$0xff]
    %v263 = vld [vmem:[#allocation5 + $0x578] sm:$0xff]
    %v264 = vld [vmem:[#allocation5 + $0x580] sm:$0xff]
    %v265 = vld [vmem:[#allocation5 + $0x588] sm:$0xff]
    %v266 = vld [vmem:[#allocation5 + $0x590] sm:$0xff]
    %v267 = vld [vmem:[#allocation5 + $0x598] sm:$0xff]
    %v268 = vld [vmem:[#allocation5 + $0x5a0] sm:$0xff]
    %v269 = vld [vmem:[#allocation5 + $0x5a8] sm:$0xff]
    %v270 = vld [vmem:[#allocation5 + $0x5b0] sm:$0xff]
    %v271 = vld [vmem:[#allocation5 + $0x5b8] sm:$0xff]
    %v272 = vld [vmem:[#allocation5 + $0x5c0] sm:$0xff]
    %v273 = vld [vmem:[#allocation5 + $0x5c8] sm:$0xff]
    %v274 = vld [vmem:[#allocation5 + $0x5d0] sm:$0xff]
    %v275 = vld [vmem:[#allocation5 + $0x5d8] sm:$0xff]
    %v276 = vld [vmem:[#allocation5 + $0x5e0] sm:$0xff]
    %v277 = vld [vmem:[#allocation5 + $0x5e8] sm:$0xff]
    %v278 = vld [vmem:[#allocation5 + $0x5f0] sm:$0xff]
    %v279 = vld [vmem:[#allocation5 + $0x5f8] sm:$0xff]
    %v280 = vld [vmem:[#allocation5 + $0x600] sm:$0xff]
    %v281 = vld [vmem:[#allocation5 + $0x608] sm:$0xff]
    %v282 = vld [vmem:[#allocation5 + $0x610] sm:$0xff]
    %v283 = vld [vmem:[#allocation5 + $0x618] sm:$0xff]
    %v284 = vld [vmem:[%s2] sm:$0x3]
    %v286 = vlaneseq
    %v287 = vshrl.u32 %v286, 7
    %v288 = vsub.s32 0, %v287
    %v289 = vrot.slane %v284, %v288
    %v290 = vlaneseq
    %v291 = vshrl.u32 %v290, 7
    %v292 = vsub.s32 1, %v291
    %v293 = vrot.slane %v284, %v292
    %vm296 = vcmask 130048
    %v298 = vsel %vm296, %v87, 0
    %300 = vmatprep.subr.mxu0 %v119
    %301 = vmatpush1.msra.mxu0 %v118
    %302 = vmatprep.subr.mxu0 %v117
    %303 = vmatpush1.msra.mxu0 %v116
    %304 = vmatprep.subr.mxu0 %v115
    %305 = vmatpush1.msra.mxu0 %v114
    %306 = vmatprep.subr.mxu0 %v113
    %307 = vmatpush1.msra.mxu0 %v112
    %308 = vmatprep.subr.mxu0 %v111
    %309 = vmatpush1.msra.mxu0 %v110
    %310 = vmatprep.subr.mxu0 %v109
    %311 = vmatpush1.msra.mxu0 %v108
    %312 = vmatprep.subr.mxu0 %v107
    %313 = vmatpush1.msra.mxu0 %v106
    %314 = vmatprep.subr.mxu0 %v105
    %315 = vmatpush1.msra.mxu0 %v104
    %316 = vmatprep.subr.mxu0 %v103
    %317 = vmatpush1.msra.mxu0 %v102
    %318 = vmatprep.subr.mxu0 %v101
    %319 = vmatpush1.msra.mxu0 %v100
    %320 = vmatprep.subr.mxu0 %v99
    %321 = vmatpush1.msra.mxu0 %v98
    %322 = vmatprep.subr.mxu0 %v97
    %323 = vmatpush1.msra.mxu0 %v96
    %324 = vmatprep.subr.mxu0 %v95
    %325 = vmatpush1.msra.mxu0 %v94
    %326 = vmatprep.subr.mxu0 %v93
    %327 = vmatpush1.msra.mxu0 %v92
    %328 = vmatprep.subr.mxu0 %v91
    %329 = vmatpush1.msra.mxu0 %v90
    %330 = vmatprep.subr.mxu0 %v89
    %331 = vmatpush1.msra.mxu0 %v88
    %332 = vmatprep.subr.mxu0 %v151
    %333 = vmatpush2.msra.mxu0 %v150
    %334 = vmatprep.subr.mxu0 %v149
    %335 = vmatpush2.msra.mxu0 %v148
    %336 = vmatprep.subr.mxu0 %v147
    %337 = vmatpush2.msra.mxu0 %v146
    %338 = vmatprep.subr.mxu0 %v145
    %339 = vmatpush2.msra.mxu0 %v144
    %340 = vmatprep.subr.mxu0 %v143
    %341 = vmatpush2.msra.mxu0 %v142
    %342 = vmatprep.subr.mxu0 %v141
    %343 = vmatpush2.msra.mxu0 %v140
    %344 = vmatprep.subr.mxu0 %v139
    %345 = vmatpush2.msra.mxu0 %v138
    %346 = vmatprep.subr.mxu0 %v137
    %347 = vmatpush2.msra.mxu0 %v136
    %348 = vmatprep.subr.mxu0 %v135
    %349 = vmatpush2.msra.mxu0 %v134
    %350 = vmatprep.subr.mxu0 %v133
    %351 = vmatpush2.msra.mxu0 %v132
    %352 = vmatprep.subr.mxu0 %v131
    %353 = vmatpush2.msra.mxu0 %v130
    %354 = vmatprep.subr.mxu0 %v129
    %355 = vmatpush2.msra.mxu0 %v128
    %356 = vmatprep.subr.mxu0 %v127
    %357 = vmatpush2.msra.mxu0 %v126
    %358 = vmatprep.subr.mxu0 %v125
    %359 = vmatpush2.msra.mxu0 %v124
    %360 = vmatprep.subr.mxu0 %v123
    %361 = vmatpush2.msra.mxu0 %v122
    %362 = vmatprep.subr.mxu0 %v121
    %363 = vmatpush2.msra.mxu0 %v120
    %364 = vmatprep.mubr.f32.mxu0 %v82
    %365 = vmatmul.mubr.f32.gmra.mxu0 %v81
    %v366 = vpop.f32.mrf.mxu0
    %v367 = vadd.f32 %v289, %v366
    %v368 = vpop.f32.mrf.mxu0
    %v369 = vadd.f32 %v293, %v368
    %370 = vdwg.mxu0
    %371 = vmatprep.subr.mxu0 %v183
    %372 = vmatpush1.msra.mxu0 %v182
    %373 = vmatprep.subr.mxu0 %v181
    %374 = vmatpush1.msra.mxu0 %v180
    %375 = vmatprep.subr.mxu0 %v179
    %376 = vmatpush1.msra.mxu0 %v178
    %377 = vmatprep.subr.mxu0 %v177
    %378 = vmatpush1.msra.mxu0 %v176
    %379 = vmatprep.subr.mxu0 %v175
    %380 = vmatpush1.msra.mxu0 %v174
    %381 = vmatprep.subr.mxu0 %v173
    %382 = vmatpush1.msra.mxu0 %v172
    %383 = vmatprep.subr.mxu0 %v171
    %384 = vmatpush1.msra.mxu0 %v170
    %385 = vmatprep.subr.mxu0 %v169
    %386 = vmatpush1.msra.mxu0 %v168
    %387 = vmatprep.subr.mxu0 %v167
    %388 = vmatpush1.msra.mxu0 %v166
    %389 = vmatprep.subr.mxu0 %v165
    %390 = vmatpush1.msra.mxu0 %v164
    %391 = vmatprep.subr.mxu0 %v163
    %392 = vmatpush1.msra.mxu0 %v162
    %393 = vmatprep.subr.mxu0 %v161
    %394 = vmatpush1.msra.mxu0 %v160
    %395 = vmatprep.subr.mxu0 %v159
    %396 = vmatpush1.msra.mxu0 %v158
    %397 = vmatprep.subr.mxu0 %v157
    %398 = vmatpush1.msra.mxu0 %v156
    %399 = vmatprep.subr.mxu0 %v155
    %400 = vmatpush1.msra.mxu0 %v154
    %401 = vmatprep.subr.mxu0 %v153
    %402 = vmatpush1.msra.mxu0 %v152
    %403 = vmatprep.subr.mxu0 %v215
    %404 = vmatpush2.msra.mxu0 %v214
    %405 = vmatprep.subr.mxu0 %v213
    %406 = vmatpush2.msra.mxu0 %v212
    %407 = vmatprep.subr.mxu0 %v211
    %408 = vmatpush2.msra.mxu0 %v210
    %409 = vmatprep.subr.mxu0 %v209
    %410 = vmatpush2.msra.mxu0 %v208
    %411 = vmatprep.subr.mxu0 %v207
    %412 = vmatpush2.msra.mxu0 %v206
    %413 = vmatprep.subr.mxu0 %v205
    %414 = vmatpush2.msra.mxu0 %v204
    %415 = vmatprep.subr.mxu0 %v203
    %416 = vmatpush2.msra.mxu0 %v202
    %417 = vmatprep.subr.mxu0 %v201
    %418 = vmatpush2.msra.mxu0 %v200
    %419 = vmatprep.subr.mxu0 %v199
    %420 = vmatpush2.msra.mxu0 %v198
    %421 = vmatprep.subr.mxu0 %v197
    %422 = vmatpush2.msra.mxu0 %v196
    %423 = vmatprep.subr.mxu0 %v195
    %424 = vmatpush2.msra.mxu0 %v194
    %425 = vmatprep.subr.mxu0 %v193
    %426 = vmatpush2.msra.mxu0 %v192
    %427 = vmatprep.subr.mxu0 %v191
    %428 = vmatpush2.msra.mxu0 %v190
    %429 = vmatprep.subr.mxu0 %v189
    %430 = vmatpush2.msra.mxu0 %v188
    %431 = vmatprep.subr.mxu0 %v187
    %432 = vmatpush2.msra.mxu0 %v186
    %433 = vmatprep.subr.mxu0 %v185
    %434 = vmatpush2.msra.mxu0 %v184
    %435 = vmatprep.mubr.f32.mxu0 %v84
    %436 = vmatmul.mubr.f32.gmra.mxu0 %v83
    %v437 = vpop.f32.mrf.mxu0
    %v438 = vadd.f32 %v367, %v437
    %v439 = vpop.f32.mrf.mxu0
    %v440 = vadd.f32 %v369, %v439
    %441 = vdwg.mxu0
    %442 = vmatprep.subr.mxu0 %v247
    %443 = vmatpush1.msra.mxu0 %v246
    %444 = vmatprep.subr.mxu0 %v245
    %445 = vmatpush1.msra.mxu0 %v244
    %446 = vmatprep.subr.mxu0 %v243
    %447 = vmatpush1.msra.mxu0 %v242
    %448 = vmatprep.subr.mxu0 %v241
    %449 = vmatpush1.msra.mxu0 %v240
    %450 = vmatprep.subr.mxu0 %v239
    %451 = vmatpush1.msra.mxu0 %v238
    %452 = vmatprep.subr.mxu0 %v237
    %453 = vmatpush1.msra.mxu0 %v236
    %454 = vmatprep.subr.mxu0 %v235
    %455 = vmatpush1.msra.mxu0 %v234
    %456 = vmatprep.subr.mxu0 %v233
    %457 = vmatpush1.msra.mxu0 %v232
    %458 = vmatprep.subr.mxu0 %v231
    %459 = vmatpush1.msra.mxu0 %v230
    %460 = vmatprep.subr.mxu0 %v229
    %461 = vmatpush1.msra.mxu0 %v228
    %462 = vmatprep.subr.mxu0 %v227
    %463 = vmatpush1.msra.mxu0 %v226
    %464 = vmatprep.subr.mxu0 %v225
    %465 = vmatpush1.msra.mxu0 %v224
    %466 = vmatprep.subr.mxu0 %v223
    %467 = vmatpush1.msra.mxu0 %v222
    %468 = vmatprep.subr.mxu0 %v221
    %469 = vmatpush1.msra.mxu0 %v220
    %470 = vmatprep.subr.mxu0 %v219
    %471 = vmatpush1.msra.mxu0 %v218
    %472 = vmatprep.subr.mxu0 %v217
    %473 = vmatpush1.msra.mxu0 %v216
    %474 = vmatprep.subr.mxu0 %v279
    %475 = vmatpush2.msra.mxu0 %v278
    %476 = vmatprep.subr.mxu0 %v277
    %477 = vmatpush2.msra.mxu0 %v276
    %478 = vmatprep.subr.mxu0 %v275
    %479 = vmatpush2.msra.mxu0 %v274
    %480 = vmatprep.subr.mxu0 %v273
    %481 = vmatpush2.msra.mxu0 %v272
    %482 = vmatprep.subr.mxu0 %v271
    %483 = vmatpush2.msra.mxu0 %v270
    %484 = vmatprep.subr.mxu0 %v269
    %485 = vmatpush2.msra.mxu0 %v268
    %486 = vmatprep.subr.mxu0 %v267
    %487 = vmatpush2.msra.mxu0 %v266
    %488 = vmatprep.subr.mxu0 %v265
    %489 = vmatpush2.msra.mxu0 %v264
    %490 = vmatprep.subr.mxu0 %v263
    %491 = vmatpush2.msra.mxu0 %v262
    %492 = vmatprep.subr.mxu0 %v261
    %493 = vmatpush2.msra.mxu0 %v260
    %494 = vmatprep.subr.mxu0 %v259
    %495 = vmatpush2.msra.mxu0 %v258
    %496 = vmatprep.subr.mxu0 %v257
    %497 = vmatpush2.msra.mxu0 %v256
    %498 = vmatprep.subr.mxu0 %v255
    %499 = vmatpush2.msra.mxu0 %v254
    %500 = vmatprep.subr.mxu0 %v253
    %501 = vmatpush2.msra.mxu0 %v252
    %502 = vmatprep.subr.mxu0 %v251
    %503 = vmatpush2.msra.mxu0 %v250
    %504 = vmatprep.subr.mxu0 %v249
    %505 = vmatpush2.msra.mxu0 %v248
    %506 = vmatprep.mubr.f32.mxu0 %v86
    %507 = vmatmul.mubr.f32.gmra.mxu0 %v85
    %v508 = vpop.f32.mrf.mxu0
    %v509 = vadd.f32 %v438, %v508
    %v510 = vpop.f32.mrf.mxu0
    %v511 = vadd.f32 %v440, %v510
    %512 = vdwg.mxu0
    %513 = vmatprep.subr.mxu0 0.0
    %514 = vmatpush1.msra.mxu0 0.0
    %515 = vmatprep.subr.mxu0 0.0
    %516 = vmatpush1.msra.mxu0 0.0
    %517 = vmatprep.subr.mxu0 0.0
    %518 = vmatpush1.msra.mxu0 0.0
    %519 = vmatprep.subr.mxu0 0.0
    %520 = vmatpush1.msra.mxu0 0.0
    %521 = vmatprep.subr.mxu0 0.0
    %522 = vmatpush1.msra.mxu0 0.0
    %523 = vmatprep.subr.mxu0 0.0
    %524 = vmatpush1.msra.mxu0 0.0
    %525 = vmatprep.subr.mxu0 0.0
    %526 = vmatpush1.msra.mxu0 0.0
    %527 = vmatprep.subr.mxu0 0.0
    %528 = vmatpush1.msra.mxu0 0.0
    %529 = vmatprep.subr.mxu0 0.0
    %530 = vmatpush1.msra.mxu0 0.0
    %531 = vmatprep.subr.mxu0 0.0
    %532 = vmatpush1.msra.mxu0 0.0
    %533 = vmatprep.subr.mxu0 0.0
    %534 = vmatpush1.msra.mxu0 0.0
    %535 = vmatprep.subr.mxu0 0.0
    %536 = vmatpush1.msra.mxu0 0.0
    %537 = vmatprep.subr.mxu0 0.0
    %538 = vmatpush1.msra.mxu0 0.0
    %539 = vmatprep.subr.mxu0 0.0
    %540 = vmatpush1.msra.mxu0 0.0
    %541 = vmatprep.subr.mxu0 %v283
    %542 = vmatpush1.msra.mxu0 %v282
    %543 = vmatprep.subr.mxu0 %v281
    %544 = vmatpush1.msra.mxu0 %v280
    %545 = vmatprep.subr.mxu0 0.0
    %546 = vmatpush2.msra.mxu0 0.0
    %547 = vmatprep.subr.mxu0 0.0
    %548 = vmatpush2.msra.mxu0 0.0
    %549 = vmatprep.subr.mxu0 0.0
    %550 = vmatpush2.msra.mxu0 0.0
    %551 = vmatprep.subr.mxu0 0.0
    %552 = vmatpush2.msra.mxu0 0.0
    %553 = vmatprep.subr.mxu0 0.0
    %554 = vmatpush2.msra.mxu0 0.0
    %555 = vmatprep.subr.mxu0 0.0
    %556 = vmatpush2.msra.mxu0 0.0
    %557 = vmatprep.subr.mxu0 0.0
    %558 = vmatpush2.msra.mxu0 0.0
    %559 = vmatprep.subr.mxu0 0.0
    %560 = vmatpush2.msra.mxu0 0.0
    %561 = vmatprep.subr.mxu0 0.0
    %562 = vmatpush2.msra.mxu0 0.0
    %563 = vmatprep.subr.mxu0 0.0
    %564 = vmatpush2.msra.mxu0 0.0
    %565 = vmatprep.subr.mxu0 0.0
    %566 = vmatpush2.msra.mxu0 0.0
    %567 = vmatprep.subr.mxu0 0.0
    %568 = vmatpush2.msra.mxu0 0.0
    %569 = vmatprep.subr.mxu0 0.0
    %570 = vmatpush2.msra.mxu0 0.0
    %571 = vmatprep.subr.mxu0 0.0
    %572 = vmatpush2.msra.mxu0 0.0
    %573 = vmatprep.subr.mxu0 0.0
    %574 = vmatpush2.msra.mxu0 0.0
    %575 = vmatprep.subr.mxu0 0.0
    %576 = vmatpush2.msra.mxu0 0.0
    %577 = vmatprep.mubr.f32.mxu0 0.0
    %578 = vmatmul.mubr.f32.gmra.mxu0 %v298
    %v579 = vpop.f32.mrf.mxu0
    %v580 = vadd.f32 %v509, %v579
    %v581 = vpop.f32.mrf.mxu0
    %v582 = vadd.f32 %v511, %v581
    %583 = vdwg.mxu0
    %vm584 = vcmp.gt.f32.partialorder %v580, 0.0
    %vm585 = vcmp.gt.f32.partialorder %v582, 0.0
    %v586 = vmul.f32 %v580, 0.2
    %v587 = vmul.f32 %v582, 0.2
    %v588 = vsel %vm584, %v580, %v586
    %v589 = vsel %vm585, %v582, %v587
    %v590 = vld [vmem:[#allocation7] sm:$0xff]
    %v591 = vld [vmem:[#allocation7 + $0x8] sm:$0xff]
    %v592 = vld [vmem:[#allocation7 + $0x10] sm:$0xff]
    %v593 = vld [vmem:[#allocation7 + $0x18] sm:$0xff]
    %v594 = vld [vmem:[#allocation7 + $0x20] sm:$0xff]
    %v595 = vld [vmem:[#allocation7 + $0x28] sm:$0xff]
    %v596 = vld [vmem:[#allocation7 + $0x30] sm:$0xff]
    %v597 = vld [vmem:[#allocation7 + $0x38] sm:$0xff]
    %v598 = vld [vmem:[#allocation7 + $0x40] sm:$0xff]
    %v599 = vld [vmem:[#allocation7 + $0x48] sm:$0xff]
    %v600 = vld [vmem:[#allocation7 + $0x50] sm:$0xff]
    %v601 = vld [vmem:[#allocation7 + $0x58] sm:$0xff]
    %v602 = vld [vmem:[#allocation7 + $0x60] sm:$0xff]
    %v603 = vld [vmem:[#allocation7 + $0x68] sm:$0xff]
    %v604 = vld [vmem:[#allocation7 + $0x70] sm:$0xff]
    %v605 = vld [vmem:[#allocation7 + $0x78] sm:$0xff]
    %v606 = vld [vmem:[#allocation7 + $0x80] sm:$0xff]
    %v607 = vld [vmem:[#allocation7 + $0x88] sm:$0xff]
    %v608 = vld [vmem:[#allocation7 + $0x90] sm:$0xff]
    %v609 = vld [vmem:[#allocation7 + $0x98] sm:$0xff]
    %v610 = vld [vmem:[#allocation7 + $0xa0] sm:$0xff]
    %v611 = vld [vmem:[#allocation7 + $0xa8] sm:$0xff]
    %v612 = vld [vmem:[#allocation7 + $0xb0] sm:$0xff]
    %v613 = vld [vmem:[#allocation7 + $0xb8] sm:$0xff]
    %v614 = vld [vmem:[#allocation7 + $0xc0] sm:$0xff]
    %v615 = vld [vmem:[#allocation7 + $0xc8] sm:$0xff]
    %v616 = vld [vmem:[#allocation7 + $0xd0] sm:$0xff]
    %v617 = vld [vmem:[#allocation7 + $0xd8] sm:$0xff]
    %v618 = vld [vmem:[#allocation7 + $0xe0] sm:$0xff]
    %v619 = vld [vmem:[#allocation7 + $0xe8] sm:$0xff]
    %v620 = vld [vmem:[#allocation7 + $0xf0] sm:$0xff]
    %v621 = vld [vmem:[#allocation7 + $0xf8] sm:$0xff]
    %v622 = vld [vmem:[#allocation7 + $0x100] sm:$0xff]
    %v623 = vld [vmem:[#allocation7 + $0x108] sm:$0xff]
    %v624 = vld [vmem:[#allocation7 + $0x110] sm:$0xff]
    %v625 = vld [vmem:[#allocation7 + $0x118] sm:$0xff]
    %v626 = vld [vmem:[#allocation7 + $0x120] sm:$0xff]
    %v627 = vld [vmem:[#allocation7 + $0x128] sm:$0xff]
    %v628 = vld [vmem:[#allocation7 + $0x130] sm:$0xff]
    %v629 = vld [vmem:[#allocation7 + $0x138] sm:$0xff]
    %v630 = vld [vmem:[#allocation7 + $0x140] sm:$0xff]
    %v631 = vld [vmem:[#allocation7 + $0x148] sm:$0xff]
    %v632 = vld [vmem:[#allocation7 + $0x150] sm:$0xff]
    %v633 = vld [vmem:[#allocation7 + $0x158] sm:$0xff]
    %v634 = vld [vmem:[#allocation7 + $0x160] sm:$0xff]
    %v635 = vld [vmem:[#allocation7 + $0x168] sm:$0xff]
    %v636 = vld [vmem:[#allocation7 + $0x170] sm:$0xff]
    %v637 = vld [vmem:[#allocation7 + $0x178] sm:$0xff]
    %v638 = vld [vmem:[#allocation7 + $0x180] sm:$0xff]
    %v639 = vld [vmem:[#allocation7 + $0x188] sm:$0xff]
    %v640 = vld [vmem:[#allocation7 + $0x190] sm:$0xff]
    %v641 = vld [vmem:[#allocation7 + $0x198] sm:$0xff]
    %v642 = vld [vmem:[#allocation7 + $0x1a0] sm:$0xff]
    %v643 = vld [vmem:[#allocation7 + $0x1a8] sm:$0xff]
    %v644 = vld [vmem:[#allocation7 + $0x1b0] sm:$0xff]
    %v645 = vld [vmem:[#allocation7 + $0x1b8] sm:$0xff]
    %v646 = vld [vmem:[#allocation7 + $0x1c0] sm:$0xff]
    %v647 = vld [vmem:[#allocation7 + $0x1c8] sm:$0xff]
    %v648 = vld [vmem:[#allocation7 + $0x1d0] sm:$0xff]
    %v649 = vld [vmem:[#allocation7 + $0x1d8] sm:$0xff]
    %v650 = vld [vmem:[#allocation7 + $0x1e0] sm:$0xff]
    %v651 = vld [vmem:[#allocation7 + $0x1e8] sm:$0xff]
    %v652 = vld [vmem:[#allocation7 + $0x1f0] sm:$0xff]
    %v653 = vld [vmem:[#allocation7 + $0x1f8] sm:$0xff]
    %v654 = vld [vmem:[%s4] sm:$0x3]
    %v656 = vlaneseq
    %v657 = vshrl.u32 %v656, 7
    %v658 = vsub.s32 0, %v657
    %v659 = vrot.slane %v654, %v658
    %v660 = vlaneseq
    %v661 = vshrl.u32 %v660, 7
    %v662 = vsub.s32 1, %v661
    %v663 = vrot.slane %v654, %v662
    %666 = vmatprep.subr.mxu0 %v621
    %667 = vmatpush1.msra.mxu0 %v620
    %668 = vmatprep.subr.mxu0 %v619
    %669 = vmatpush1.msra.mxu0 %v618
    %670 = vmatprep.subr.mxu0 %v617
    %671 = vmatpush1.msra.mxu0 %v616
    %672 = vmatprep.subr.mxu0 %v615
    %673 = vmatpush1.msra.mxu0 %v614
    %674 = vmatprep.subr.mxu0 %v613
    %675 = vmatpush1.msra.mxu0 %v612
    %676 = vmatprep.subr.mxu0 %v611
    %677 = vmatpush1.msra.mxu0 %v610
    %678 = vmatprep.subr.mxu0 %v609
    %679 = vmatpush1.msra.mxu0 %v608
    %680 = vmatprep.subr.mxu0 %v607
    %681 = vmatpush1.msra.mxu0 %v606
    %682 = vmatprep.subr.mxu0 %v605
    %683 = vmatpush1.msra.mxu0 %v604
    %684 = vmatprep.subr.mxu0 %v603
    %685 = vmatpush1.msra.mxu0 %v602
    %686 = vmatprep.subr.mxu0 %v601
    %687 = vmatpush1.msra.mxu0 %v600
    %688 = vmatprep.subr.mxu0 %v599
    %689 = vmatpush1.msra.mxu0 %v598
    %690 = vmatprep.subr.mxu0 %v597
    %691 = vmatpush1.msra.mxu0 %v596
    %692 = vmatprep.subr.mxu0 %v595
    %693 = vmatpush1.msra.mxu0 %v594
    %694 = vmatprep.subr.mxu0 %v593
    %695 = vmatpush1.msra.mxu0 %v592
    %696 = vmatprep.subr.mxu0 %v591
    %697 = vmatpush1.msra.mxu0 %v590
    %698 = vmatprep.subr.mxu0 %v653
    %699 = vmatpush2.msra.mxu0 %v652
    %700 = vmatprep.subr.mxu0 %v651
    %701 = vmatpush2.msra.mxu0 %v650
    %702 = vmatprep.subr.mxu0 %v649
    %703 = vmatpush2.msra.mxu0 %v648
    %704 = vmatprep.subr.mxu0 %v647
    %705 = vmatpush2.msra.mxu0 %v646
    %706 = vmatprep.subr.mxu0 %v645
    %707 = vmatpush2.msra.mxu0 %v644
    %708 = vmatprep.subr.mxu0 %v643
    %709 = vmatpush2.msra.mxu0 %v642
    %710 = vmatprep.subr.mxu0 %v641
    %711 = vmatpush2.msra.mxu0 %v640
    %712 = vmatprep.subr.mxu0 %v639
    %713 = vmatpush2.msra.mxu0 %v638
    %714 = vmatprep.subr.mxu0 %v637
    %715 = vmatpush2.msra.mxu0 %v636
    %716 = vmatprep.subr.mxu0 %v635
    %717 = vmatpush2.msra.mxu0 %v634
    %718 = vmatprep.subr.mxu0 %v633
    %719 = vmatpush2.msra.mxu0 %v632
    %720 = vmatprep.subr.mxu0 %v631
    %721 = vmatpush2.msra.mxu0 %v630
    %722 = vmatprep.subr.mxu0 %v629
    %723 = vmatpush2.msra.mxu0 %v628
    %724 = vmatprep.subr.mxu0 %v627
    %725 = vmatpush2.msra.mxu0 %v626
    %726 = vmatprep.subr.mxu0 %v625
    %727 = vmatpush2.msra.mxu0 %v624
    %728 = vmatprep.subr.mxu0 %v623
    %729 = vmatpush2.msra.mxu0 %v622
    %730 = vmatprep.mubr.f32.mxu0 %v589
    %731 = vmatmul.mubr.f32.gmra.mxu0 %v588
    %v732 = vpop.f32.mrf.mxu0
    %v733 = vadd.f32 %v659, %v732
    %v734 = vpop.f32.mrf.mxu0
    %v735 = vadd.f32 %v663, %v734
    %736 = vdwg.mxu0
    %vm737 = vcmp.gt.f32.partialorder %v733, 0.0
    %vm738 = vcmp.gt.f32.partialorder %v735, 0.0
    %v739 = vmul.f32 %v733, 0.2
    %v740 = vmul.f32 %v735, 0.2
    %v741 = vsel %vm737, %v733, %v739
    %v742 = vsel %vm738, %v735, %v740
    %v743 = vld [vmem:[#allocation8] sm:$0xff]
    %v744 = vld [vmem:[#allocation8 + $0x8] sm:$0xff]
    %v745 = vld [vmem:[#allocation8 + $0x10] sm:$0xff]
    %v746 = vld [vmem:[#allocation8 + $0x18] sm:$0xff]
    %v747 = vld [vmem:[#allocation8 + $0x20] sm:$0xff]
    %v748 = vld [vmem:[#allocation8 + $0x28] sm:$0xff]
    %v749 = vld [vmem:[#allocation8 + $0x30] sm:$0xff]
    %v750 = vld [vmem:[#allocation8 + $0x38] sm:$0xff]
    %v751 = vld [vmem:[#allocation8 + $0x40] sm:$0xff]
    %v752 = vld [vmem:[#allocation8 + $0x48] sm:$0xff]
    %v753 = vld [vmem:[#allocation8 + $0x50] sm:$0xff]
    %v754 = vld [vmem:[#allocation8 + $0x58] sm:$0xff]
    %v755 = vld [vmem:[#allocation8 + $0x60] sm:$0xff]
    %v756 = vld [vmem:[#allocation8 + $0x68] sm:$0xff]
    %v757 = vld [vmem:[#allocation8 + $0x70] sm:$0xff]
    %v758 = vld [vmem:[#allocation8 + $0x78] sm:$0xff]
    %v759 = vld [vmem:[#allocation8 + $0x80] sm:$0xff]
    %v760 = vld [vmem:[#allocation8 + $0x88] sm:$0xff]
    %v761 = vld [vmem:[#allocation8 + $0x90] sm:$0xff]
    %v762 = vld [vmem:[#allocation8 + $0x98] sm:$0xff]
    %v763 = vld [vmem:[#allocation8 + $0xa0] sm:$0xff]
    %v764 = vld [vmem:[#allocation8 + $0xa8] sm:$0xff]
    %v765 = vld [vmem:[#allocation8 + $0xb0] sm:$0xff]
    %v766 = vld [vmem:[#allocation8 + $0xb8] sm:$0xff]
    %v767 = vld [vmem:[#allocation8 + $0xc0] sm:$0xff]
    %v768 = vld [vmem:[#allocation8 + $0xc8] sm:$0xff]
    %v769 = vld [vmem:[#allocation8 + $0xd0] sm:$0xff]
    %v770 = vld [vmem:[#allocation8 + $0xd8] sm:$0xff]
    %v771 = vld [vmem:[#allocation8 + $0xe0] sm:$0xff]
    %v772 = vld [vmem:[#allocation8 + $0xe8] sm:$0xff]
    %v773 = vld [vmem:[#allocation8 + $0xf0] sm:$0xff]
    %v774 = vld [vmem:[#allocation8 + $0xf8] sm:$0xff]
    %775 = vmatprep.subr.mxu0 0.0
    %776 = vmatpush1.msra.mxu0 %v758
    %777 = vmatprep.subr.mxu0 0.0
    %778 = vmatpush1.msra.mxu0 %v757
    %779 = vmatprep.subr.mxu0 0.0
    %780 = vmatpush1.msra.mxu0 %v756
    %781 = vmatprep.subr.mxu0 0.0
    %782 = vmatpush1.msra.mxu0 %v755
    %783 = vmatprep.subr.mxu0 0.0
    %784 = vmatpush1.msra.mxu0 %v754
    %785 = vmatprep.subr.mxu0 0.0
    %786 = vmatpush1.msra.mxu0 %v753
    %787 = vmatprep.subr.mxu0 0.0
    %788 = vmatpush1.msra.mxu0 %v752
    %789 = vmatprep.subr.mxu0 0.0
    %790 = vmatpush1.msra.mxu0 %v751
    %791 = vmatprep.subr.mxu0 0.0
    %792 = vmatpush1.msra.mxu0 %v750
    %793 = vmatprep.subr.mxu0 0.0
    %794 = vmatpush1.msra.mxu0 %v749
    %795 = vmatprep.subr.mxu0 0.0
    %796 = vmatpush1.msra.mxu0 %v748
    %797 = vmatprep.subr.mxu0 0.0
    %798 = vmatpush1.msra.mxu0 %v747
    %799 = vmatprep.subr.mxu0 0.0
    %800 = vmatpush1.msra.mxu0 %v746
    %801 = vmatprep.subr.mxu0 0.0
    %802 = vmatpush1.msra.mxu0 %v745
    %803 = vmatprep.subr.mxu0 0.0
    %804 = vmatpush1.msra.mxu0 %v744
    %805 = vmatprep.subr.mxu0 0.0
    %806 = vmatpush1.msra.mxu0 %v743
    %807 = vmatprep.subr.mxu0 0.0
    %808 = vmatpush2.msra.mxu0 %v774
    %809 = vmatprep.subr.mxu0 0.0
    %810 = vmatpush2.msra.mxu0 %v773
    %811 = vmatprep.subr.mxu0 0.0
    %812 = vmatpush2.msra.mxu0 %v772
    %813 = vmatprep.subr.mxu0 0.0
    %814 = vmatpush2.msra.mxu0 %v771
    %815 = vmatprep.subr.mxu0 0.0
    %816 = vmatpush2.msra.mxu0 %v770
    %817 = vmatprep.subr.mxu0 0.0
    %818 = vmatpush2.msra.mxu0 %v769
    %819 = vmatprep.subr.mxu0 0.0
    %820 = vmatpush2.msra.mxu0 %v768
    %821 = vmatprep.subr.mxu0 0.0
    %822 = vmatpush2.msra.mxu0 %v767
    %823 = vmatprep.subr.mxu0 0.0
    %824 = vmatpush2.msra.mxu0 %v766
    %825 = vmatprep.subr.mxu0 0.0
    %826 = vmatpush2.msra.mxu0 %v765
    %827 = vmatprep.subr.mxu0 0.0
    %828 = vmatpush2.msra.mxu0 %v764
    %829 = vmatprep.subr.mxu0 0.0
    %830 = vmatpush2.msra.mxu0 %v763
    %831 = vmatprep.subr.mxu0 0.0
    %832 = vmatpush2.msra.mxu0 %v762
    %833 = vmatprep.subr.mxu0 0.0
    %834 = vmatpush2.msra.mxu0 %v761
    %835 = vmatprep.subr.mxu0 0.0
    %836 = vmatpush2.msra.mxu0 %v760
    %837 = vmatprep.subr.mxu0 0.0
    %838 = vmatpush2.msra.mxu0 %v759
    %839 = vmatprep.mubr.f32.mxu0 %v742
    %840 = vmatmul.mubr.f32.gmra.mxu0 %v741
    %v841 = vpop.f32.mrf.mxu0
    %v842 = vadd.f32 0.0, %v841
    %v843 = vpop.f32.mrf.mxu0
    %844 = vdwg.mxu0
    %v845 = vld [vmem:[#allocation2] sm:$0x1]
    %v847 = vlaneseq
    %v848 = vshrl.u32 %v847, 7
    %v849 = vsub.s32 0, %v848
    %v850 = vrot.slane %v845, %v849
    %v852 = vadd.f32 %v842, %v850
    %v853 = vxor.u32 %v852, 2147483648
    %v854 = vmul.f32 %v853, 1.442695
    %v855 = vpow.pop %v854
    %v856 = vadd.f32 %v855, 1.0
    %v857 = vrcp.pop %v856
    %v858 = vmul.f32 1.0, %v857
    %vm859 = vcmask 7168
    %860 = vst.msk [vmem:[%s7] sm:$0xff] %vm859, %v858
    // Predicated region
    $region46: #{discriminator_forward.1} parent=1 // pred_check
      _
    $region47: #{discriminator_forward.1} parent=1 // pred_check_branch
      %862 = sbr.rel (0) target = $region49
    $region48: #{discriminator_forward.1} parent=1 // pred_region
      _
    $region49: #{discriminator_forward.1} parent=1 // pred_fallthru
      _
    // Predicated region
    $region50: #{discriminator_forward.1} parent=1 // pred_check
      _
    $region51: #{discriminator_forward.1} parent=1 // pred_check_branch
      %864 = sbr.rel (0) target = $region53
    $region52: #{discriminator_forward.1} parent=1 // pred_region
      _
    $region53: #{discriminator_forward.1} parent=1 // pred_fallthru
      _
    %865 = vsyncpa [#allocation4], 1
    %866 = vsyncpa [#allocation6], 1
    %867 = vsyncpa [#allocation9], 1

</llo_original>
